<compile_context>
chip_gen: v7x
topology: tpu7x:2x2x1
jax: 0.10.0
libtpu: 0.0.40
codegen_flags: <defaults>
</compile_context>

<pallas_src>
import functools

import jax
import jax.numpy as jnp
import numpy as np
from jax.experimental import pallas as pl
from jax.experimental.pallas import tpu as pltpu


def _sublane_granularity(dtype):
    """Rows must be a multiple of this (packed sublanes): 8 f32, 16 bf16, 32 int8."""
    return {4: 8, 2: 16, 1: 32}.get(jnp.dtype(dtype).itemsize, 8)


def _round_up(a, b):
    return (a + b - 1) // b * b


def _padded_tile_bytes(C, hb, W, scale, dtype):
    """Per-grid-step VMEM need with (sublane, 128-lane) padding, double-buffered
    in/out blocks (what Mosaic actually allocates), one-hot and f32 intermediate."""
    sub = _sublane_granularity(dtype)
    itemsize = jnp.dtype(dtype).itemsize
    pin = C * _round_up(hb, sub) * _round_up(W, 128) * itemsize
    pout = C * _round_up(scale * hb, sub) * _round_up(scale * W, 128) * itemsize
    ponehot = _round_up(W, sub) * _round_up(scale * W, 128) * itemsize
    py_f32 = C * _round_up(hb, 8) * _round_up(scale * W, 128) * 4
    return 2 * (pin + pout) + 2 * ponehot + py_f32


def _upsample_nearest_kernel(x_ref, g_ref, out_ref, *, scale, use_strided_store):
    """x_ref:  (C, Hb, W)           input row tile
       g_ref:  (W, scale*W)         hoisted one-hot column-duplication matrix
       out_ref:(C, scale*Hb, s*W)   dense NCHW output row tile
    """
    C, Hb, W = x_ref.shape
    sW = scale * W

    # Lane-axis (W) duplication: exact one-hot matmul on the otherwise-idle MXU.
    # Keeps the output lane axis dense (s*W) with no minor-dim interleave reshape.
    x2d = x_ref[...].reshape(C * Hb, W)                      # leading-dim merge (free)
    y = jnp.dot(x2d, g_ref[...], preferred_element_type=jnp.float32)
    y = y.astype(out_ref.dtype).reshape(C, Hb, sW)           # leading-dim split (free)

    if use_strided_store:
        # Sublane-strided stores: output row scale*h + di  <-  input row h.
        # `scale` half-masked lane-dense stores, zero extra compute.
        for di in range(scale):
            out_ref[:, pl.ds(di, Hb, stride=scale), :] = y
    else:
        # Fallback (only if strided vector stores are unavailable): build the dense
        # (C, scale*Hb, s*W) slab with a per-channel one-hot left matmul (MXU) and
        # issue one full dense store. Exact (single 1.0 tap per output row).
        r_idx = jax.lax.broadcasted_iota(jnp.int32, (scale * Hb, Hb), 0)
        h_idx = jax.lax.broadcasted_iota(jnp.int32, (scale * Hb, Hb), 1)
        rmat = jnp.where(
            (r_idx >= scale * h_idx) & (r_idx < scale * (h_idx + 1)), 1.0, 0.0
        ).astype(y.dtype)
        rmat = jnp.broadcast_to(rmat, (C, scale * Hb, Hb))
        slab = jnp.einsum("crh,chw->crw", rmat, y,
                          preferred_element_type=jnp.float32)
        out_ref[...] = slab.astype(out_ref.dtype)


def _pick_row_tile(N, C, H, W, scale, dtype, budget_bytes):
    """Largest row tile (multiple of the dtype sublane granularity, dividing H) whose
    padded double-buffered footprint fits the budget; prefer whole images, but force
    an H split when the grid would otherwise have < 2 steps (v7x has 2 TensorCores)."""
    sub = _sublane_granularity(dtype)
    cands = sorted({hb for hb in range(sub, H + 1, sub) if H % hb == 0} | {H},
                   reverse=True)
    fitting = [hb for hb in cands
               if _padded_tile_bytes(C, hb, W, scale, dtype) <= budget_bytes]
    fitting = fitting or [cands[-1]]
    multi = [hb for hb in fitting if N * (H // hb) >= 2]
    return multi[0] if multi else fitting[0]


def upsample_nearest(x, scale=2, row_tile=None):
    """Nearest-neighbour upsample by integer `scale` (NCHW in, NCHW out)."""
    assert x.ndim == 4, x.shape
    assert jnp.issubdtype(x.dtype, jnp.floating), x.dtype
    scale = int(scale)
    assert scale >= 1
    N, C, H, W = x.shape
    sW = scale * W
    itemsize = jnp.dtype(x.dtype).itemsize
    sub = _sublane_granularity(x.dtype)

    # VMEM ceiling from the actual chip (64 MiB/TC on v7x, 128 MiB on v5e/v6e),
    # leaving headroom for compiler scratch.
    try:
        vmem_cap = int(pltpu.get_tpu_info().vmem_capacity_bytes)
    except Exception:
        vmem_cap = 64 * 1024 * 1024          # conservative (v7x-sized) default
    vmem_ceiling = min(int(0.7 * vmem_cap), 64 * 1024 * 1024)

    if row_tile is None:
        Hb = _pick_row_tile(N, C, H, W, scale, x.dtype, int(0.8 * vmem_ceiling))
    else:
        Hb = int(row_tile)
    assert H % Hb == 0 and (Hb == H or Hb % sub == 0), (H, Hb, sub)

    need = _padded_tile_bytes(C, Hb, W, scale, x.dtype)
    vmem_limit = min(vmem_ceiling, max(16 * 1024 * 1024, need + (4 << 20)))
    vmem_limit = int(max(vmem_limit, need + (2 << 20)))

    # Hoisted one-hot column-duplication matrix: G[j, scale*j : scale*(j+1)] = 1.
    # Fetched once (constant block index) and kept VMEM-resident.
    onehot = jnp.asarray(
        np.kron(np.eye(W, dtype=np.float32), np.ones((1, scale), np.float32)),
        dtype=x.dtype)

    grid = (N, H // Hb)
    out_shape = jax.ShapeDtypeStruct((N, C, scale * H, sW), x.dtype)
    cost = pl.CostEstimate(
        flops=2 * N * C * H * W * sW,
        transcendentals=0,
        bytes_accessed=int(x.size * itemsize
                           + N * C * scale * H * sW * itemsize
                           + W * sW * itemsize))

    def build(use_strided_store):
        return pl.pallas_call(
            functools.partial(_upsample_nearest_kernel, scale=scale,
                              use_strided_store=use_strided_store),
            out_shape=out_shape,
            grid_spec=pltpu.PrefetchScalarGridSpec(
                num_scalar_prefetch=0,
                grid=grid,
                in_specs=[
                    pl.BlockSpec((None, C, Hb, W), lambda n, h: (n, 0, h, 0)),
                    pl.BlockSpec((W, sW), lambda n, h: (0, 0)),
                ],
                out_specs=pl.BlockSpec((None, C, scale * Hb, sW),
                                       lambda n, h: (n, 0, h, 0)),
            ),
            compiler_params=pltpu.CompilerParams(
                dimension_semantics=("parallel", "parallel"),
                vmem_limit_bytes=vmem_limit),
            cost_estimate=cost,
        )

    try:
        out = build(use_strided_store=True)(x, onehot)
        return jax.block_until_ready(out)
    except Exception:  # strided vector store rejected -> dense-slab MXU fallback
        out = build(use_strided_store=False)(x, onehot)
        return jax.block_until_ready(out)


if __name__ == "__main__":
    N, C, H, W = 2, 4, 16, 16
    key = jax.random.PRNGKey(0)
    x = jax.random.normal(key, (N, C, H, W), dtype=jnp.float32)

    # Pure-JAX reference: nearest upsample scale 2 == repeat along H and W.
    ref = jax.block_until_ready(jnp.repeat(jnp.repeat(x, 2, axis=2), 2, axis=3))

    # Auto-tiled path (whole-image row tiles, grid pipelined over batch).
    out = jax.block_until_ready(upsample_nearest(x, scale=2))
    assert out.shape == (N, C, 2 * H, 2 * W), out.shape
    np.testing.assert_allclose(np.asarray(out), np.asarray(ref), rtol=0, atol=0)

    # Explicit row tiling (grid = (2, 2)): exercises the multi-step pipeline.
    out2 = jax.block_until_ready(upsample_nearest(x, scale=2, row_tile=8))
    np.testing.assert_allclose(np.asarray(out2), np.asarray(ref), rtol=0, atol=0)

    print("KERNEL_OK")
</pallas_src>

<mosaic_0001>
module attributes {stable_mosaic.version = 11 : i64} {
  func.func @_upsample_nearest_kernel(%arg0: i32, %arg1: i32, %arg2: memref<1x4x16x16xf32, #tpu.memory_space<vmem>>, %arg3: memref<16x32xf32, #tpu.memory_space<vmem>>, %arg4: memref<1x4x32x32xf32, #tpu.memory_space<vmem>>) attributes {dimension_semantics = [#tpu.dimension_semantics<parallel>, #tpu.dimension_semantics<parallel>], iteration_bounds = array<i64: 2, 1>, scalar_prefetch = 0 : i64, scratch_operands = 0 : i64, tpu.core_type = #tpu.core_type<tc>, window_params = [{transform_indices = @transform_0, window_bounds = array<i64: 1, 4, 16, 16>}, {pipeline_mode = #tpu.pipeline_mode<synchronous>, transform_indices = @transform_1, window_bounds = array<i64: 16, 32>}, {transform_indices = @transform_2, window_bounds = array<i64: 1, 4, 32, 32>}]} {
    %c0 = arith.constant 0 : index
    %c0_0 = arith.constant 0 : index
    %c0_1 = arith.constant 0 : index
    %c0_2 = arith.constant 0 : index
    %0 = vector.load %arg2[%c0, %c0_0, %c0_1, %c0_2] : memref<1x4x16x16xf32, #tpu.memory_space<vmem>>, vector<1x4x16x16xf32>
    %1 = vector.shape_cast %0 : vector<1x4x16x16xf32> to vector<4x16x16xf32>
    %2 = vector.shape_cast %1 : vector<4x16x16xf32> to vector<64x16xf32>
    %c0_3 = arith.constant 0 : index
    %c0_4 = arith.constant 0 : index
    %3 = vector.load %arg3[%c0_3, %c0_4] : memref<16x32xf32, #tpu.memory_space<vmem>>, vector<16x32xf32>
    %cst = arith.constant dense<0.000000e+00> : vector<64x32xf32>
    %4 = tpu.matmul %2, %3, %cst {dimension_numbers = #tpu.dot_dimension_numbers<[1], [0], [0], [1], [0, 0, 1, 1], [], []>} : vector<64x16xf32>, vector<16x32xf32>, vector<64x32xf32> -> vector<64x32xf32>
    %5 = vector.shape_cast %4 : vector<64x32xf32> to vector<4x16x32xf32>
    %c0_5 = arith.constant 0 : index
    %c0_6 = arith.constant 0 : index
    %c0_7 = arith.constant 0 : index
    %c0_8 = arith.constant 0 : index
    %6 = tpu.strided_load %arg4[%c0_5, %c0_6, %c0_7, %c0_8] {strides = array<i32: 1, 1, 2, 1>} : memref<1x4x32x32xf32, #tpu.memory_space<vmem>>, vector<1x4x16x32xf32>
    %7 = vector.shape_cast %6 : vector<1x4x16x32xf32> to vector<4x16x32xf32>
    %8 = vector.shape_cast %5 : vector<4x16x32xf32> to vector<1x4x16x32xf32>
    tpu.strided_store %arg4[%c0_5, %c0_6, %c0_7, %c0_8], %8 {strides = array<i32: 1, 1, 2, 1>} : memref<1x4x32x32xf32, #tpu.memory_space<vmem>>, vector<1x4x16x32xf32>
    %c0_9 = arith.constant 0 : index
    %c0_10 = arith.constant 0 : index
    %c1 = arith.constant 1 : index
    %c0_11 = arith.constant 0 : index
    %9 = tpu.strided_load %arg4[%c0_9, %c0_10, %c1, %c0_11] {strides = array<i32: 1, 1, 2, 1>} : memref<1x4x32x32xf32, #tpu.memory_space<vmem>>, vector<1x4x16x32xf32>
    %10 = vector.shape_cast %9 : vector<1x4x16x32xf32> to vector<4x16x32xf32>
    %11 = vector.shape_cast %5 : vector<4x16x32xf32> to vector<1x4x16x32xf32>
    tpu.strided_store %arg4[%c0_9, %c0_10, %c1, %c0_11], %11 {strides = array<i32: 1, 1, 2, 1>} : memref<1x4x32x32xf32, #tpu.memory_space<vmem>>, vector<1x4x16x32xf32>
    return
  }
  func.func @transform_0(%arg0: i32, %arg1: i32) -> (i32, i32, i32, i32) {
    %c0_i32 = arith.constant 0 : i32
    %c0_i32_0 = arith.constant 0 : i32
    %c0_i32_1 = arith.constant 0 : i32
    return %arg0, %c0_i32, %arg1, %c0_i32_0 : i32, i32, i32, i32
  }
  func.func @transform_1(%arg0: i32, %arg1: i32) -> (i32, i32) {
    %c0_i32 = arith.constant 0 : i32
    %c0_i32_0 = arith.constant 0 : i32
    %c0_i32_1 = arith.constant 0 : i32
    return %c0_i32, %c0_i32_0 : i32, i32
  }
  func.func @transform_2(%arg0: i32, %arg1: i32) -> (i32, i32, i32, i32) {
    %c0_i32 = arith.constant 0 : i32
    %c0_i32_0 = arith.constant 0 : i32
    %c0_i32_1 = arith.constant 0 : i32
    return %arg0, %c0_i32, %arg1, %c0_i32_0 : i32, i32, i32, i32
  }
}

module attributes {stable_mosaic.version = 11 : i64} {
  func.func @_upsample_nearest_kernel(%arg0: i32, %arg1: i32, %arg2: memref<1x4x16x16xf32, #tpu.memory_space<vmem>>, %arg3: memref<16x32xf32, #tpu.memory_space<vmem>>, %arg4: memref<1x4x32x32xf32, #tpu.memory_space<vmem>>) attributes {dimension_semantics = [#tpu.dimension_semantics<parallel>, #tpu.dimension_semantics<parallel>], iteration_bounds = array<i64: 2, 1>, scalar_prefetch = 0 : i64, scratch_operands = 0 : i64, tpu.core_type = #tpu.core_type<tc>, window_params = [{transform_indices = @transform_0, window_bounds = array<i64: 1, 4, 16, 16>}, {pipeline_mode = #tpu.pipeline_mode<synchronous>, transform_indices = @transform_1, window_bounds = array<i64: 16, 32>}, {transform_indices = @transform_2, window_bounds = array<i64: 1, 4, 32, 32>}]} {
    %c0 = arith.constant 0 : index
    %c0_0 = arith.constant 0 : index
    %c0_1 = arith.constant 0 : index
    %c0_2 = arith.constant 0 : index
    %0 = vector.load %arg2[%c0, %c0_0, %c0_1, %c0_2] : memref<1x4x16x16xf32, #tpu.memory_space<vmem>>, vector<1x4x16x16xf32>
    %1 = vector.shape_cast %0 : vector<1x4x16x16xf32> to vector<4x16x16xf32>
    %2 = vector.shape_cast %1 : vector<4x16x16xf32> to vector<64x16xf32>
    %c0_3 = arith.constant 0 : index
    %c0_4 = arith.constant 0 : index
    %3 = vector.load %arg3[%c0_3, %c0_4] : memref<16x32xf32, #tpu.memory_space<vmem>>, vector<16x32xf32>
    %cst = arith.constant dense<0.000000e+00> : vector<64x32xf32>
    %4 = tpu.matmul %2, %3, %cst {dimension_numbers = #tpu.dot_dimension_numbers<[1], [0], [0], [1], [0, 0, 1, 1], [], []>} : vector<64x16xf32>, vector<16x32xf32>, vector<64x32xf32> -> vector<64x32xf32>
    %5 = vector.shape_cast %4 : vector<64x32xf32> to vector<4x16x32xf32>
    %6 = tpu.iota {dimensions = array<i32: 0>} : vector<32x16xi32>
    %7 = tpu.iota {dimensions = array<i32: 1>} : vector<32x16xi32>
    %c2_i32 = arith.constant 2 : i32
    %8 = vector.broadcast %c2_i32 : i32 to vector<32x16xi32>
    %9 = arith.muli %8, %7 : vector<32x16xi32>
    %10 = arith.cmpi sge, %6, %9 : vector<32x16xi32>
    %c1_i32 = arith.constant 1 : i32
    %11 = vector.broadcast %c1_i32 : i32 to vector<32x16xi32>
    %12 = arith.addi %7, %11 : vector<32x16xi32>
    %c2_i32_5 = arith.constant 2 : i32
    %13 = vector.broadcast %c2_i32_5 : i32 to vector<32x16xi32>
    %14 = arith.muli %13, %12 : vector<32x16xi32>
    %15 = arith.cmpi slt, %6, %14 : vector<32x16xi32>
    %16 = arith.andi %10, %15 : vector<32x16xi1>
    %cst_6 = arith.constant 1.000000e+00 : f32
    %cst_7 = arith.constant 0.000000e+00 : f32
    %17 = vector.broadcast %cst_6 : f32 to vector<32x16xf32>
    %18 = vector.broadcast %cst_7 : f32 to vector<32x16xf32>
    %19 = arith.select %16, %17, %18 : vector<32x16xi1>, vector<32x16xf32>
    %20 = vector.shape_cast %19 : vector<32x16xf32> to vector<1x32x16xf32>
    %21 = vector.broadcast %20 : vector<1x32x16xf32> to vector<4x32x16xf32>
    "tpu.trace_start"() <{level = 10 : i32, message = "crh,chw->crw"}> : () -> ()
    %cst_8 = arith.constant dense<0.000000e+00> : vector<4x32x32xf32>
    %22 = tpu.matmul %21, %5, %cst_8 {dimension_numbers = #tpu.dot_dimension_numbers<[2], [1], [1], [2], [0, 0, 0, 1, 1, 2], [0], [0]>} : vector<4x32x16xf32>, vector<4x16x32xf32>, vector<4x32x32xf32> -> vector<4x32x32xf32>
    "tpu.trace_stop"() : () -> ()
    %c0_9 = arith.constant 0 : index
    %c0_10 = arith.constant 0 : index
    %c0_11 = arith.constant 0 : index
    %c0_12 = arith.constant 0 : index
    %23 = vector.load %arg4[%c0_9, %c0_10, %c0_11, %c0_12] : memref<1x4x32x32xf32, #tpu.memory_space<vmem>>, vector<1x4x32x32xf32>
    %24 = vector.shape_cast %23 : vector<1x4x32x32xf32> to vector<4x32x32xf32>
    %25 = vector.shape_cast %22 : vector<4x32x32xf32> to vector<1x4x32x32xf32>
    tpu.vector_store %arg4[%c0_9, %c0_10, %c0_11, %c0_12], %25 {strides = array<i32>} : memref<1x4x32x32xf32, #tpu.memory_space<vmem>>, vector<1x4x32x32xf32>,
    return
  }
  func.func @transform_0(%arg0: i32, %arg1: i32) -> (i32, i32, i32, i32) {
    %c0_i32 = arith.constant 0 : i32
    %c0_i32_0 = arith.constant 0 : i32
    %c0_i32_1 = arith.constant 0 : i32
    return %arg0, %c0_i32, %arg1, %c0_i32_0 : i32, i32, i32, i32
  }
  func.func @transform_1(%arg0: i32, %arg1: i32) -> (i32, i32) {
    %c0_i32 = arith.constant 0 : i32
    %c0_i32_0 = arith.constant 0 : i32
    %c0_i32_1 = arith.constant 0 : i32
    return %c0_i32, %c0_i32_0 : i32, i32
  }
  func.func @transform_2(%arg0: i32, %arg1: i32) -> (i32, i32, i32, i32) {
    %c0_i32 = arith.constant 0 : i32
    %c0_i32_0 = arith.constant 0 : i32
    %c0_i32_1 = arith.constant 0 : i32
    return %arg0, %c0_i32, %arg1, %c0_i32_0 : i32, i32, i32, i32
  }
}

</mosaic_0001>

<llo_original>
// kernel: tpu_custom_call.1
$region0: #{tpu_custom_call.1}
  #allocation0 [shape = 'u32[]', space=smem, size = 0x4, offset = 0x4, fixed_abs, tag = 'smem constant byte address 0x4 - core index']
  #allocation1 [shape = 'u32[144,128]{1,0:T(1,128)}', space=vmem, size = 0x12000, scoped, tag = 'internal scratch']
  %s0 = inlined_call_operand.hbm [shape: f32[2,4,16,16], index: 0, kind: input, shape index: {}]
  %s1 = inlined_call_operand.hbm [shape: f32[16,32], index: 1, kind: input, shape index: {}]
  %s2 = inlined_call_operand.hbm [shape: f32[2,4,32,32], index: 2, kind: output, shape index: {}]
  %s3 = sld [smem:[#allocation0]]
  $region49: #{tpu_custom_call.1} parent=0
    _
  %s5 = ssub.s32 1, %s3
  %s6 = scalar_select 0, %s5, %s3
  $region1: #{tpu_custom_call.1} parent=0
    #allocation2 [shape = 'u8[65536]{0}', space=vmem, size = 0x10000, scoped, tag = 'input window, operand 0']
    #allocation3 [shape = 's32[2]{0}', space=sflag, size = 0x8, scoped, tag = 'scoped memory for tpu_custom_call.1']
    #allocation4 [shape = 's32[2]{0}', space=sflag, size = 0x8, scoped, tag = 'scoped memory for tpu_custom_call.1']
    #allocation5 [shape = 'u8[8192]{0}', space=vmem, size = 0x2000, scoped, tag = 'input window, operand 1, single buffered']
    #allocation6 [shape = 's32[1]{0}', space=sflag, size = 0x4, scoped, tag = 'scoped memory for tpu_custom_call.1']
    #allocation7 [shape = 'u8[131072]{0}', space=vmem, size = 0x20000, scoped, tag = 'output window, operand 0']
    %7 = vsyncpa [#allocation3], 0
    %s8 = scalar_lea.sflag [#allocation3], 1
    %9 = vsyncpa %s8, 0
    %10 = vsyncpa [#allocation6], 0
    %11 = vsyncpa [#allocation4], 0
    %s12 = scalar_lea.sflag [#allocation4], 1
    %13 = vsyncpa %s12, 0
    loop: start=0, step=1, limit=4
    $region2: #{tpu_custom_call.1} parent=1 // loop_pre_header
      _
    $region3: #{tpu_custom_call.1} parent=1 // loop_header
      %s15 = sphi 0, %s19
      %p16 = scmp.ge.s32.totalorder %s15, 4
      %s22 = sphi 0, %s34
      %s23 = sphi 0, %s30
      %s24 = sphi 0, %s22
      %s25 = sphi 0, %s23
      %s26 = sphi 0, %s24
      %s27 = sphi 0, %s25
      %s39 = sphi 0, %s41
      %s42 = sphi 0, %s39
      %s43 = sphi 0, %s42
      %s59 = sphi 0, %s43
      %s63 = sphi 0, %s63
      %s65 = sphi 0, %s63
      %s66 = sphi 0, %s65
      %s80 = sphi 0, %s66
      %s88 = sphi 0, %s90
      %s91 = sphi 0, %s88
      %s92 = sphi 0, %s91
      %s108 = sphi 0, %s92
    $region4: #{tpu_custom_call.1} parent=1 // loop_header_branch
      %18 = sbr.rel (%p16) target = $region8
    $region5: #{tpu_custom_call.1} parent=1 // loop_body
      %s20 = ssub.s32 %s15, 1
      %s21 = ssub.s32 %s15, 2
      %s28 = sadd.s32 1, %s23
      %p29 = scmp.ge.s32.totalorder %s28, 1
      %s30 = scalar_select %p29, 0, %s28
      %s31 = sadd.s32 1, %s22
      %s32 = scalar_select %p29, %s31, %s22
      %p33 = scmp.ge.s32.totalorder %s32, 2
      %s34 = scalar_select %p33, 0, %s32
      %s35 = ssub.s32 %s22, %s34
      %s36 = ssub.s32 %s23, %s30
      %s37 = sor.u32 %s35, %s36
      %p38 = scmp.eq.s32.totalorder %s37, 0
      %s40 = sadd.s32 %s39, 1
      %s41 = scalar_select %p38, %s39, %s40
      %p44 = pneg %p38
      %p45 = scmp.eq.s32.totalorder %s15, 1
      %p46 = por %p44, %p45
      %p47 = scmp.ne.s32.totalorder %s39, %s42
      %p48 = scmp.eq.s32.totalorder %s15, 0
      %p49 = por %p47, %p48
      %p50 = scmp.ne.s32.totalorder %s39, %s42
      %p51 = scmp.eq.s32.totalorder %s20, 1
      %p52 = por %p50, %p51
      %p53 = scmp.ne.s32.totalorder %s42, %s43
      %p54 = scmp.eq.s32.totalorder %s20, 0
      %p55 = por %p53, %p54
      %p56 = scmp.ne.s32.totalorder %s42, %s43
      %p57 = scmp.eq.s32.totalorder %s21, 1
      %p58 = por %p56, %p57
      %p60 = scmp.ne.s32.totalorder %s43, %s59
      %p61 = scmp.eq.s32.totalorder %s21, 0
      %p62 = por %p60, %p61
      %s64 = sadd.s32 %s63, 1
      %p67 = scmp.eq.s32.totalorder %s15, 1
      %p68 = scmp.ne.s32.totalorder %s63, %s65
      %p69 = scmp.eq.s32.totalorder %s15, 0
      %p70 = por %p68, %p69
      %p71 = scmp.ne.s32.totalorder %s63, %s65
      %p72 = scmp.eq.s32.totalorder %s20, 1
      %p73 = por %p71, %p72
      %p74 = scmp.ne.s32.totalorder %s65, %s66
      %p75 = scmp.eq.s32.totalorder %s20, 0
      %p76 = por %p74, %p75
      %p77 = scmp.ne.s32.totalorder %s65, %s66
      %p78 = scmp.eq.s32.totalorder %s21, 1
      %p79 = por %p77, %p78
      %p81 = scmp.ne.s32.totalorder %s66, %s80
      %p82 = scmp.eq.s32.totalorder %s21, 0
      %p83 = por %p81, %p82
      %s84 = ssub.s32 %s22, %s34
      %s85 = ssub.s32 %s23, %s30
      %s86 = sor.u32 %s84, %s85
      %p87 = scmp.eq.s32.totalorder %s86, 0
      %s89 = sadd.s32 %s88, 1
      %s90 = scalar_select %p87, %s88, %s89
      %p93 = pneg %p87
      %p94 = scmp.eq.s32.totalorder %s15, 1
      %p95 = por %p93, %p94
      %p96 = scmp.ne.s32.totalorder %s88, %s91
      %p97 = scmp.eq.s32.totalorder %s15, 0
      %p98 = por %p96, %p97
      %p99 = scmp.ne.s32.totalorder %s88, %s91
      %p100 = scmp.eq.s32.totalorder %s20, 1
      %p101 = por %p99, %p100
      %p102 = scmp.ne.s32.totalorder %s91, %s92
      %p103 = scmp.eq.s32.totalorder %s20, 0
      %p104 = por %p102, %p103
      %p105 = scmp.ne.s32.totalorder %s91, %s92
      %p106 = scmp.eq.s32.totalorder %s21, 1
      %p107 = por %p105, %p106
      %p109 = scmp.ne.s32.totalorder %s92, %s108
      %p110 = scmp.eq.s32.totalorder %s21, 0
      %p111 = por %p109, %p110
      %p112 = scmp.le.s32.totalorder 1, %s15
      %p113 = scmp.lt.s32.totalorder %s15, 3
      %p114 = pnand %p112, %p113
      %p115 = pneg %p114
      // Predicated region
      $region9: #{tpu_custom_call.1} parent=5 // pred_check
        _
      $region10: #{tpu_custom_call.1} parent=5 // pred_check_branch
        %117 = sbr.rel (%p114) target = $region12
      $region11: #{tpu_custom_call.1} parent=5 // pred_region
        %s118 = ssub.s32 %s15, 1
        // Predicated region
        $region13: #{tpu_custom_call.1} parent=11 // pred_check
          %p119 = pneg %p76
        $region14: #{tpu_custom_call.1} parent=11 // pred_check_branch
          %121 = sbr.rel (%p119) target = $region16
        $region15: #{tpu_custom_call.1} parent=11 // pred_region
          %s123 = ssub.s32 256, 256
          %124 = vsyncadd [#allocation6], %s123
          %s125 = sshll.u32 [#allocation5], 4
          %s126 = int_to_ptr.vmem [resolvable:$true] %s125
          %131 = dma.hbm_to_vmem [thread:$0]  %s1, 256, %s126, [#allocation6], 128, 128, 8
        $region16: #{tpu_custom_call.1} parent=11 // pred_fallthru
          _
      $region12: #{tpu_custom_call.1} parent=5 // pred_fallthru
        _
      %p132 = scmp.lt.s32.totalorder %s15, 2
      // Predicated region
      $region17: #{tpu_custom_call.1} parent=5 // pred_check
        %p133 = pneg %p132
      $region18: #{tpu_custom_call.1} parent=5 // pred_check_branch
        %135 = sbr.rel (%p133) target = $region20
      $region19: #{tpu_custom_call.1} parent=5 // pred_region
        // Predicated region
        $region21: #{tpu_custom_call.1} parent=19 // pred_check
          %p136 = pneg %p49
        $region22: #{tpu_custom_call.1} parent=19 // pred_check_branch
          %138 = sbr.rel (%p136) target = $region24
        $region23: #{tpu_custom_call.1} parent=19 // pred_region
          %s139 = sand.u32 %s39, 1
          %s140 = scalar_lea.sflag [#allocation3], %s139
          %s141 = sand.u32 %s39, 1
          %s142 = smul.addr %s141, 64
          %s143 = scalar_lea.vmem [#allocation2], %s142
          %s144 = smul.u32 2, %s23
          %s146 = ssub.s32 1024, 1024
          %147 = vsyncadd %s140, %s146
          %s148 = smul.addr %s22, 8
          %s149 = sadd.s32 %s144, %s148
          %s150 = smul.addr %s149, 128
          %s151 = scalar_lea.hbm %s0, %s150
          %s152 = sshll.u32 %s143, 4
          %s153 = int_to_ptr.vmem [resolvable:$true] %s152
          %158 = dma.hbm_to_vmem [thread:$0]  %s151, 1024, %s153, %s140, 128, 128, 8
        $region24: #{tpu_custom_call.1} parent=19 // pred_fallthru
          _
      $region20: #{tpu_custom_call.1} parent=5 // pred_fallthru
        _
      %p159 = scmp.le.s32.totalorder 1, %s15
      %p160 = scmp.lt.s32.totalorder %s15, 3
      %p161 = pnand %p159, %p160
      %p162 = pneg %p161
      // Predicated region
      $region25: #{tpu_custom_call.1} parent=5 // pred_check
        _
      $region26: #{tpu_custom_call.1} parent=5 // pred_check_branch
        %164 = sbr.rel (%p161) target = $region28
      $region27: #{tpu_custom_call.1} parent=5 // pred_region
        %s165 = ssub.s32 %s15, 1
        %s166 = sand.u32 %s42, 1
        %s167 = scalar_lea.sflag [#allocation3], %s166
        %s168 = sand.u32 %s42, 1
        %s169 = smul.addr %s168, 64
        %s170 = scalar_lea.vmem [#allocation2], %s169
        // Predicated region
        $region29: #{tpu_custom_call.1} parent=27 // pred_check
          %p171 = pneg %p55
        $region30: #{tpu_custom_call.1} parent=27 // pred_check_branch
          %173 = sbr.rel (%p171) target = $region32
        $region31: #{tpu_custom_call.1} parent=27 // pred_region
          %174 = dma.done %s167, 1024
        $region32: #{tpu_custom_call.1} parent=27 // pred_fallthru
          _
        // Predicated region
        $region33: #{tpu_custom_call.1} parent=27 // pred_check
          %p175 = pneg %p76
        $region34: #{tpu_custom_call.1} parent=27 // pred_check_branch
          %177 = sbr.rel (%p175) target = $region36
        $region35: #{tpu_custom_call.1} parent=27 // pred_region
          %178 = dma.done [#allocation6], 256
        $region36: #{tpu_custom_call.1} parent=27 // pred_fallthru
          _
        %s179 = sand.u32 %s42, 1
        %s180 = scalar_lea.sflag [#allocation3], %s179
        %s181 = sand.u32 %s42, 1
        %s182 = smul.addr %s181, 64
        %s183 = scalar_lea.vmem [#allocation2], %s182
        %p184 = pneg %p55
        %p185 = pneg %p52
        %p186 = pneg %p76
        %p187 = pneg %p73
        %p188 = pneg %p104
        %p189 = pneg %p101
        %s190 = sand.u32 %s91, 1
        %s191 = scalar_lea.sflag [#allocation4], %s190
        %s192 = sand.u32 %s91, 1
        %s193 = smul.addr %s192, 128
        %s194 = scalar_lea.vmem [#allocation7], %s193
        %s195 = smul.u32 2, %s25
        %s196 = smul.u32 4, %s25
        %v197 = vld [vmem:[%s170] sm:$0xff]
        %v198 = vld [vmem:[%s170 + $0x8] sm:$0xff]
        %v199 = vld [vmem:[%s170 + $0x10] sm:$0xff]
        %v200 = vld [vmem:[%s170 + $0x18] sm:$0xff]
        %v201 = vld [vmem:[%s170 + $0x20] sm:$0xff]
        %v202 = vld [vmem:[%s170 + $0x28] sm:$0xff]
        %v203 = vld [vmem:[%s170 + $0x30] sm:$0xff]
        %v204 = vld [vmem:[%s170 + $0x38] sm:$0xff]
        %v205 = vld [vmem:[#allocation5] sm:$0xff]
        %v206 = vld [vmem:[#allocation5 + $0x8] sm:$0xff]
        %vm207 = vcmask 130048
        %v209 = vsel %vm207, %v197, 0
        %v212 = vsel %vm207, %v198, 0
        %v215 = vsel %vm207, %v199, 0
        %v218 = vsel %vm207, %v200, 0
        %v221 = vsel %vm207, %v201, 0
        %v224 = vsel %vm207, %v202, 0
        %v227 = vsel %vm207, %v203, 0
        %v230 = vsel %vm207, %v204, 0
        %232 = vmatprep.subr.mxu0 0.0
        %233 = vmatpush1.msra.mxu0 %v205
        %234 = vmatprep.subr.mxu0 0.0
        %235 = vmatpush1.msra.mxu0 %v206
        %236 = vmatprep.subr.mxu0 0.0
        %237 = vmatpush1.msra.mxu0 0.0
        %238 = vmatprep.subr.mxu0 0.0
        %239 = vmatpush1.msra.mxu0 0.0
        %240 = vmatprep.subr.mxu0 0.0
        %241 = vmatpush1.msra.mxu0 0.0
        %242 = vmatprep.subr.mxu0 0.0
        %243 = vmatpush1.msra.mxu0 0.0
        %244 = vmatprep.subr.mxu0 0.0
        %245 = vmatpush1.msra.mxu0 0.0
        %246 = vmatprep.subr.mxu0 0.0
        %247 = vmatpush1.msra.mxu0 0.0
        %248 = vmatprep.subr.mxu0 0.0
        %249 = vmatpush1.msra.mxu0 0.0
        %250 = vmatprep.subr.mxu0 0.0
        %251 = vmatpush1.msra.mxu0 0.0
        %252 = vmatprep.subr.mxu0 0.0
        %253 = vmatpush1.msra.mxu0 0.0
        %254 = vmatprep.subr.mxu0 0.0
        %255 = vmatpush1.msra.mxu0 0.0
        %256 = vmatprep.subr.mxu0 0.0
        %257 = vmatpush1.msra.mxu0 0.0
        %258 = vmatprep.subr.mxu0 0.0
        %259 = vmatpush1.msra.mxu0 0.0
        %260 = vmatprep.subr.mxu0 0.0
        %261 = vmatpush1.msra.mxu0 0.0
        %262 = vmatprep.subr.mxu0 0.0
        %263 = vmatpush1.msra.mxu0 0.0
        %264 = vmatprep.subr.mxu0 0.0
        %265 = vmatpush1.msra.mxu0 0.0
        %266 = vmatprep.subr.mxu0 0.0
        %267 = vmatpush1.msra.mxu0 0.0
        %268 = vmatprep.subr.mxu0 0.0
        %269 = vmatpush1.msra.mxu0 0.0
        %270 = vmatprep.subr.mxu0 0.0
        %271 = vmatpush1.msra.mxu0 0.0
        %272 = vmatprep.subr.mxu0 0.0
        %273 = vmatpush1.msra.mxu0 0.0
        %274 = vmatprep.subr.mxu0 0.0
        %275 = vmatpush1.msra.mxu0 0.0
        %276 = vmatprep.subr.mxu0 0.0
        %277 = vmatpush1.msra.mxu0 0.0
        %278 = vmatprep.subr.mxu0 0.0
        %279 = vmatpush1.msra.mxu0 0.0
        %280 = vmatprep.subr.mxu0 0.0
        %281 = vmatpush1.msra.mxu0 0.0
        %282 = vmatprep.subr.mxu0 0.0
        %283 = vmatpush1.msra.mxu0 0.0
        %284 = vmatprep.subr.mxu0 0.0
        %285 = vmatpush1.msra.mxu0 0.0
        %286 = vmatprep.subr.mxu0 0.0
        %287 = vmatpush1.msra.mxu0 0.0
        %288 = vmatprep.subr.mxu0 0.0
        %289 = vmatpush1.msra.mxu0 0.0
        %290 = vmatprep.subr.mxu0 0.0
        %291 = vmatpush1.msra.mxu0 0.0
        %292 = vmatprep.subr.mxu0 0.0
        %293 = vmatpush1.msra.mxu0 0.0
        %294 = vmatprep.subr.mxu0 0.0
        %295 = vmatpush1.msra.mxu0 0.0
        %296 = vmatprep.mubr.f32.mxu0 0.0
        %297 = vmatmul.mubr.f32.gmra.mrb[0].mxu0 %v209
        %v298 = vpop.f32.mrb[0].mxu0
        %v299 = vadd.f32 0.0, %v298
        %v300 = vpop.f32.mrb[0].mxu0
        %301 = vmatprep.mubr.f32.mxu0 0.0
        %302 = vmatmul.mubr.f32.gmra.mrb[0].mxu0 %v212
        %v303 = vpop.f32.mrb[0].mxu0
        %v304 = vadd.f32 0.0, %v303
        %v305 = vpop.f32.mrb[0].mxu0
        %306 = vmatprep.mubr.f32.mxu0 0.0
        %307 = vmatmul.mubr.f32.gmra.mrb[0].mxu0 %v215
        %v308 = vpop.f32.mrb[0].mxu0
        %v309 = vadd.f32 0.0, %v308
        %v310 = vpop.f32.mrb[0].mxu0
        %311 = vmatprep.mubr.f32.mxu0 0.0
        %312 = vmatmul.mubr.f32.gmra.mrb[0].mxu0 %v218
        %v313 = vpop.f32.mrb[0].mxu0
        %v314 = vadd.f32 0.0, %v313
        %v315 = vpop.f32.mrb[0].mxu0
        %316 = vmatprep.mubr.f32.mxu0 0.0
        %317 = vmatmul.mubr.f32.gmra.mrb[0].mxu0 %v221
        %v318 = vpop.f32.mrb[0].mxu0
        %v319 = vadd.f32 0.0, %v318
        %v320 = vpop.f32.mrb[0].mxu0
        %321 = vmatprep.mubr.f32.mxu0 0.0
        %322 = vmatmul.mubr.f32.gmra.mrb[0].mxu0 %v224
        %v323 = vpop.f32.mrb[0].mxu0
        %v324 = vadd.f32 0.0, %v323
        %v325 = vpop.f32.mrb[0].mxu0
        %326 = vmatprep.mubr.f32.mxu0 0.0
        %327 = vmatmul.mubr.f32.gmra.mrb[0].mxu0 %v227
        %v328 = vpop.f32.mrb[0].mxu0
        %v329 = vadd.f32 0.0, %v328
        %v330 = vpop.f32.mrb[0].mxu0
        %331 = vmatprep.mubr.f32.mxu0 0.0
        %332 = vmatmul.mubr.f32.gmra.mrb[0].mxu0 %v230
        %v333 = vpop.f32.mrb[0].mxu0
        %v334 = vadd.f32 0.0, %v333
        %v335 = vpop.f32.mrb[0].mxu0
        %336 = vdwg.mxu0
        %337 = vst [vmem:[%s194] ss:$2 sm:$0xff] %v299
        %s338 = scalar_lea.vmem %s194, 16 [#allocation7]
        %339 = vst [vmem:[%s338] ss:$2 sm:$0xff] %v304
        %s340 = scalar_lea.vmem %s194, 32 [#allocation7]
        %341 = vst [vmem:[%s340] ss:$2 sm:$0xff] %v309
        %s342 = scalar_lea.vmem %s194, 48 [#allocation7]
        %343 = vst [vmem:[%s342] ss:$2 sm:$0xff] %v314
        %s344 = scalar_lea.vmem %s194, 64 [#allocation7]
        %345 = vst [vmem:[%s344] ss:$2 sm:$0xff] %v319
        %s346 = scalar_lea.vmem %s194, 80 [#allocation7]
        %347 = vst [vmem:[%s346] ss:$2 sm:$0xff] %v324
        %s348 = scalar_lea.vmem %s194, 96 [#allocation7]
        %349 = vst [vmem:[%s348] ss:$2 sm:$0xff] %v329
        %s350 = scalar_lea.vmem %s194, 112 [#allocation7]
        %351 = vst [vmem:[%s350] ss:$2 sm:$0xff] %v334
        %s352 = scalar_lea.vmem %s194, 1 [#allocation7]
        %353 = vst [vmem:[%s352] ss:$2 sm:$0xff] %v299
        %s354 = scalar_lea.vmem %s194, 17 [#allocation7]
        %355 = vst [vmem:[%s354] ss:$2 sm:$0xff] %v304
        %s356 = scalar_lea.vmem %s194, 33 [#allocation7]
        %357 = vst [vmem:[%s356] ss:$2 sm:$0xff] %v309
        %s358 = scalar_lea.vmem %s194, 49 [#allocation7]
        %359 = vst [vmem:[%s358] ss:$2 sm:$0xff] %v314
        %s360 = scalar_lea.vmem %s194, 65 [#allocation7]
        %361 = vst [vmem:[%s360] ss:$2 sm:$0xff] %v319
        %s362 = scalar_lea.vmem %s194, 81 [#allocation7]
        %363 = vst [vmem:[%s362] ss:$2 sm:$0xff] %v324
        %s364 = scalar_lea.vmem %s194, 97 [#allocation7]
        %365 = vst [vmem:[%s364] ss:$2 sm:$0xff] %v329
        %s366 = scalar_lea.vmem %s194, 113 [#allocation7]
        %367 = vst [vmem:[%s366] ss:$2 sm:$0xff] %v334
        %s368 = sand.u32 %s91, 1
        %s369 = scalar_lea.sflag [#allocation4], %s368
        %s370 = sand.u32 %s91, 1
        %s371 = smul.addr %s370, 128
        %s372 = scalar_lea.vmem [#allocation7], %s371
        // Predicated region
        $region37: #{tpu_custom_call.1} parent=27 // pred_check
          %p373 = pneg %p101
        $region38: #{tpu_custom_call.1} parent=27 // pred_check_branch
          %375 = sbr.rel (%p373) target = $region40
        $region39: #{tpu_custom_call.1} parent=27 // pred_region
          %s376 = smul.u32 4, %s25
          %s378 = ssub.s32 2048, 2048
          %379 = vsyncadd %s369, %s378
          %s380 = smul.addr %s24, 16
          %s381 = sadd.s32 %s376, %s380
          %s382 = smul.addr %s381, 128
          %s383 = scalar_lea.hbm %s2, %s382
          %s384 = sshll.u32 %s372, 4
          %s385 = int_to_ptr.vmem [resolvable:$true] %s384
          %390 = dma.vmem_to_hbm [thread:$0]  %s385, 2048, %s383, %s369, 128, 128, 8
        $region40: #{tpu_custom_call.1} parent=27 // pred_fallthru
          _
      $region28: #{tpu_custom_call.1} parent=5 // pred_fallthru
        _
      %p391 = scmp.le.s32.totalorder 2, %s15
      // Predicated region
      $region41: #{tpu_custom_call.1} parent=5 // pred_check
        %p392 = pneg %p391
      $region42: #{tpu_custom_call.1} parent=5 // pred_check_branch
        %394 = sbr.rel (%p392) target = $region44
      $region43: #{tpu_custom_call.1} parent=5 // pred_region
        %s395 = ssub.s32 %s15, 2
        // Predicated region
        $region45: #{tpu_custom_call.1} parent=43 // pred_check
          %p396 = pneg %p107
        $region46: #{tpu_custom_call.1} parent=43 // pred_check_branch
          %398 = sbr.rel (%p396) target = $region48
        $region47: #{tpu_custom_call.1} parent=43 // pred_region
          %s399 = sand.u32 %s92, 1
          %s400 = scalar_lea.sflag [#allocation4], %s399
          %s401 = sand.u32 %s92, 1
          %s402 = smul.addr %s401, 128
          %s403 = scalar_lea.vmem [#allocation7], %s402
          %404 = dma.done %s400, 2048
        $region48: #{tpu_custom_call.1} parent=43 // pred_fallthru
          _
      $region44: #{tpu_custom_call.1} parent=5 // pred_fallthru
        _
    $region6: #{tpu_custom_call.1} parent=1 // loop_footer
      %s19 = sadd.s32 1, %s15
    $region7: #{tpu_custom_call.1} parent=1 // loop_footer_branch
      %14 = sbr.rel target = $region3
    $region8: #{tpu_custom_call.1} parent=1 // loop_exit
      _
    %405 = vsyncpa [#allocation3], 1
    %s406 = scalar_lea.sflag [#allocation3], 1
    %407 = vsyncpa %s406, 1
    %408 = vsyncpa [#allocation6], 1
    %409 = vsyncpa [#allocation4], 1
    %s410 = scalar_lea.sflag [#allocation4], 1
    %411 = vsyncpa %s410, 1

// kernel: tpu_custom_call.1
$region0: #{tpu_custom_call.1}
  #allocation0 [shape = 'u32[]', space=smem, size = 0x4, offset = 0x4, fixed_abs, tag = 'smem constant byte address 0x4 - core index']
  #allocation1 [shape = 'u32[144,128]{1,0:T(1,128)}', space=vmem, size = 0x12000, scoped, tag = 'internal scratch']
  %s0 = inlined_call_operand.hbm [shape: f32[2,4,16,16], index: 0, kind: input, shape index: {}]
  %s1 = inlined_call_operand.hbm [shape: f32[16,32], index: 1, kind: input, shape index: {}]
  %s2 = inlined_call_operand.hbm [shape: f32[2,4,32,32], index: 2, kind: output, shape index: {}]
  %s3 = sld [smem:[#allocation0]]
  $region49: #{tpu_custom_call.1} parent=0
    _
  %s5 = ssub.s32 1, %s3
  %s6 = scalar_select 0, %s5, %s3
  $region1: #{tpu_custom_call.1} parent=0
    #allocation2 [shape = 'u8[65536]{0}', space=vmem, size = 0x10000, scoped, tag = 'input window, operand 0']
    #allocation3 [shape = 's32[2]{0}', space=sflag, size = 0x8, scoped, tag = 'scoped memory for tpu_custom_call.1']
    #allocation4 [shape = 's32[2]{0}', space=sflag, size = 0x8, scoped, tag = 'scoped memory for tpu_custom_call.1']
    #allocation5 [shape = 'u8[8192]{0}', space=vmem, size = 0x2000, scoped, tag = 'input window, operand 1, single buffered']
    #allocation6 [shape = 's32[1]{0}', space=sflag, size = 0x4, scoped, tag = 'scoped memory for tpu_custom_call.1']
    #allocation7 [shape = 'u8[131072]{0}', space=vmem, size = 0x20000, scoped, tag = 'output window, operand 0']
    %7 = vsyncpa [#allocation3], 0
    %s8 = scalar_lea.sflag [#allocation3], 1
    %9 = vsyncpa %s8, 0
    %10 = vsyncpa [#allocation6], 0
    %11 = vsyncpa [#allocation4], 0
    %s12 = scalar_lea.sflag [#allocation4], 1
    %13 = vsyncpa %s12, 0
    loop: start=0, step=1, limit=4
    $region2: #{tpu_custom_call.1} parent=1 // loop_pre_header
      _
    $region3: #{tpu_custom_call.1} parent=1 // loop_header
      %s15 = sphi 0, %s19
      %p16 = scmp.ge.s32.totalorder %s15, 4
      %s22 = sphi 0, %s34
      %s23 = sphi 0, %s30
      %s24 = sphi 0, %s22
      %s25 = sphi 0, %s23
      %s26 = sphi 0, %s24
      %s27 = sphi 0, %s25
      %s39 = sphi 0, %s41
      %s42 = sphi 0, %s39
      %s43 = sphi 0, %s42
      %s59 = sphi 0, %s43
      %s63 = sphi 0, %s63
      %s65 = sphi 0, %s63
      %s66 = sphi 0, %s65
      %s80 = sphi 0, %s66
      %s88 = sphi 0, %s90
      %s91 = sphi 0, %s88
      %s92 = sphi 0, %s91
      %s108 = sphi 0, %s92
    $region4: #{tpu_custom_call.1} parent=1 // loop_header_branch
      %18 = sbr.rel (%p16) target = $region8
    $region5: #{tpu_custom_call.1} parent=1 // loop_body
      %s20 = ssub.s32 %s15, 1
      %s21 = ssub.s32 %s15, 2
      %s28 = sadd.s32 1, %s23
      %p29 = scmp.ge.s32.totalorder %s28, 1
      %s30 = scalar_select %p29, 0, %s28
      %s31 = sadd.s32 1, %s22
      %s32 = scalar_select %p29, %s31, %s22
      %p33 = scmp.ge.s32.totalorder %s32, 2
      %s34 = scalar_select %p33, 0, %s32
      %s35 = ssub.s32 %s22, %s34
      %s36 = ssub.s32 %s23, %s30
      %s37 = sor.u32 %s35, %s36
      %p38 = scmp.eq.s32.totalorder %s37, 0
      %s40 = sadd.s32 %s39, 1
      %s41 = scalar_select %p38, %s39, %s40
      %p44 = pneg %p38
      %p45 = scmp.eq.s32.totalorder %s15, 1
      %p46 = por %p44, %p45
      %p47 = scmp.ne.s32.totalorder %s39, %s42
      %p48 = scmp.eq.s32.totalorder %s15, 0
      %p49 = por %p47, %p48
      %p50 = scmp.ne.s32.totalorder %s39, %s42
      %p51 = scmp.eq.s32.totalorder %s20, 1
      %p52 = por %p50, %p51
      %p53 = scmp.ne.s32.totalorder %s42, %s43
      %p54 = scmp.eq.s32.totalorder %s20, 0
      %p55 = por %p53, %p54
      %p56 = scmp.ne.s32.totalorder %s42, %s43
      %p57 = scmp.eq.s32.totalorder %s21, 1
      %p58 = por %p56, %p57
      %p60 = scmp.ne.s32.totalorder %s43, %s59
      %p61 = scmp.eq.s32.totalorder %s21, 0
      %p62 = por %p60, %p61
      %s64 = sadd.s32 %s63, 1
      %p67 = scmp.eq.s32.totalorder %s15, 1
      %p68 = scmp.ne.s32.totalorder %s63, %s65
      %p69 = scmp.eq.s32.totalorder %s15, 0
      %p70 = por %p68, %p69
      %p71 = scmp.ne.s32.totalorder %s63, %s65
      %p72 = scmp.eq.s32.totalorder %s20, 1
      %p73 = por %p71, %p72
      %p74 = scmp.ne.s32.totalorder %s65, %s66
      %p75 = scmp.eq.s32.totalorder %s20, 0
      %p76 = por %p74, %p75
      %p77 = scmp.ne.s32.totalorder %s65, %s66
      %p78 = scmp.eq.s32.totalorder %s21, 1
      %p79 = por %p77, %p78
      %p81 = scmp.ne.s32.totalorder %s66, %s80
      %p82 = scmp.eq.s32.totalorder %s21, 0
      %p83 = por %p81, %p82
      %s84 = ssub.s32 %s22, %s34
      %s85 = ssub.s32 %s23, %s30
      %s86 = sor.u32 %s84, %s85
      %p87 = scmp.eq.s32.totalorder %s86, 0
      %s89 = sadd.s32 %s88, 1
      %s90 = scalar_select %p87, %s88, %s89
      %p93 = pneg %p87
      %p94 = scmp.eq.s32.totalorder %s15, 1
      %p95 = por %p93, %p94
      %p96 = scmp.ne.s32.totalorder %s88, %s91
      %p97 = scmp.eq.s32.totalorder %s15, 0
      %p98 = por %p96, %p97
      %p99 = scmp.ne.s32.totalorder %s88, %s91
      %p100 = scmp.eq.s32.totalorder %s20, 1
      %p101 = por %p99, %p100
      %p102 = scmp.ne.s32.totalorder %s91, %s92
      %p103 = scmp.eq.s32.totalorder %s20, 0
      %p104 = por %p102, %p103
      %p105 = scmp.ne.s32.totalorder %s91, %s92
      %p106 = scmp.eq.s32.totalorder %s21, 1
      %p107 = por %p105, %p106
      %p109 = scmp.ne.s32.totalorder %s92, %s108
      %p110 = scmp.eq.s32.totalorder %s21, 0
      %p111 = por %p109, %p110
      %p112 = scmp.le.s32.totalorder 1, %s15
      %p113 = scmp.lt.s32.totalorder %s15, 3
      %p114 = pnand %p112, %p113
      %p115 = pneg %p114
      // Predicated region
      $region9: #{tpu_custom_call.1} parent=5 // pred_check
        _
      $region10: #{tpu_custom_call.1} parent=5 // pred_check_branch
        %117 = sbr.rel (%p114) target = $region12
      $region11: #{tpu_custom_call.1} parent=5 // pred_region
        %s118 = ssub.s32 %s15, 1
        // Predicated region
        $region13: #{tpu_custom_call.1} parent=11 // pred_check
          %p119 = pneg %p76
        $region14: #{tpu_custom_call.1} parent=11 // pred_check_branch
          %121 = sbr.rel (%p119) target = $region16
        $region15: #{tpu_custom_call.1} parent=11 // pred_region
          %s123 = ssub.s32 256, 256
          %124 = vsyncadd [#allocation6], %s123
          %s125 = sshll.u32 [#allocation5], 4
          %s126 = int_to_ptr.vmem [resolvable:$true] %s125
          %131 = dma.hbm_to_vmem [thread:$0]  %s1, 256, %s126, [#allocation6], 128, 128, 8
        $region16: #{tpu_custom_call.1} parent=11 // pred_fallthru
          _
      $region12: #{tpu_custom_call.1} parent=5 // pred_fallthru
        _
      %p132 = scmp.lt.s32.totalorder %s15, 2
      // Predicated region
      $region17: #{tpu_custom_call.1} parent=5 // pred_check
        %p133 = pneg %p132
      $region18: #{tpu_custom_call.1} parent=5 // pred_check_branch
        %135 = sbr.rel (%p133) target = $region20
      $region19: #{tpu_custom_call.1} parent=5 // pred_region
        // Predicated region
        $region21: #{tpu_custom_call.1} parent=19 // pred_check
          %p136 = pneg %p49
        $region22: #{tpu_custom_call.1} parent=19 // pred_check_branch
          %138 = sbr.rel (%p136) target = $region24
        $region23: #{tpu_custom_call.1} parent=19 // pred_region
          %s139 = sand.u32 %s39, 1
          %s140 = scalar_lea.sflag [#allocation3], %s139
          %s141 = sand.u32 %s39, 1
          %s142 = smul.addr %s141, 64
          %s143 = scalar_lea.vmem [#allocation2], %s142
          %s144 = smul.u32 2, %s23
          %s146 = ssub.s32 1024, 1024
          %147 = vsyncadd %s140, %s146
          %s148 = smul.addr %s22, 8
          %s149 = sadd.s32 %s144, %s148
          %s150 = smul.addr %s149, 128
          %s151 = scalar_lea.hbm %s0, %s150
          %s152 = sshll.u32 %s143, 4
          %s153 = int_to_ptr.vmem [resolvable:$true] %s152
          %158 = dma.hbm_to_vmem [thread:$0]  %s151, 1024, %s153, %s140, 128, 128, 8
        $region24: #{tpu_custom_call.1} parent=19 // pred_fallthru
          _
      $region20: #{tpu_custom_call.1} parent=5 // pred_fallthru
        _
      %p159 = scmp.le.s32.totalorder 1, %s15
      %p160 = scmp.lt.s32.totalorder %s15, 3
      %p161 = pnand %p159, %p160
      %p162 = pneg %p161
      // Predicated region
      $region25: #{tpu_custom_call.1} parent=5 // pred_check
        _
      $region26: #{tpu_custom_call.1} parent=5 // pred_check_branch
        %164 = sbr.rel (%p161) target = $region28
      $region27: #{tpu_custom_call.1} parent=5 // pred_region
        %s165 = ssub.s32 %s15, 1
        %s166 = sand.u32 %s42, 1
        %s167 = scalar_lea.sflag [#allocation3], %s166
        %s168 = sand.u32 %s42, 1
        %s169 = smul.addr %s168, 64
        %s170 = scalar_lea.vmem [#allocation2], %s169
        // Predicated region
        $region29: #{tpu_custom_call.1} parent=27 // pred_check
          %p171 = pneg %p55
        $region30: #{tpu_custom_call.1} parent=27 // pred_check_branch
          %173 = sbr.rel (%p171) target = $region32
        $region31: #{tpu_custom_call.1} parent=27 // pred_region
          %174 = dma.done %s167, 1024
        $region32: #{tpu_custom_call.1} parent=27 // pred_fallthru
          _
        // Predicated region
        $region33: #{tpu_custom_call.1} parent=27 // pred_check
          %p175 = pneg %p76
        $region34: #{tpu_custom_call.1} parent=27 // pred_check_branch
          %177 = sbr.rel (%p175) target = $region36
        $region35: #{tpu_custom_call.1} parent=27 // pred_region
          %178 = dma.done [#allocation6], 256
        $region36: #{tpu_custom_call.1} parent=27 // pred_fallthru
          _
        %s179 = sand.u32 %s42, 1
        %s180 = scalar_lea.sflag [#allocation3], %s179
        %s181 = sand.u32 %s42, 1
        %s182 = smul.addr %s181, 64
        %s183 = scalar_lea.vmem [#allocation2], %s182
        %p184 = pneg %p55
        %p185 = pneg %p52
        %p186 = pneg %p76
        %p187 = pneg %p73
        %p188 = pneg %p104
        %p189 = pneg %p101
        %s190 = sand.u32 %s91, 1
        %s191 = scalar_lea.sflag [#allocation4], %s190
        %s192 = sand.u32 %s91, 1
        %s193 = smul.addr %s192, 128
        %s194 = scalar_lea.vmem [#allocation7], %s193
        %s195 = smul.u32 2, %s25
        %s196 = smul.u32 4, %s25
        %v197 = vld [vmem:[%s170] sm:$0xff]
        %v198 = vld [vmem:[%s170 + $0x8] sm:$0xff]
        %v199 = vld [vmem:[%s170 + $0x10] sm:$0xff]
        %v200 = vld [vmem:[%s170 + $0x18] sm:$0xff]
        %v201 = vld [vmem:[%s170 + $0x20] sm:$0xff]
        %v202 = vld [vmem:[%s170 + $0x28] sm:$0xff]
        %v203 = vld [vmem:[%s170 + $0x30] sm:$0xff]
        %v204 = vld [vmem:[%s170 + $0x38] sm:$0xff]
        %v205 = vld [vmem:[#allocation5] sm:$0xff]
        %v206 = vld [vmem:[#allocation5 + $0x8] sm:$0xff]
        %vm207 = vcmask 130048
        %v209 = vsel %vm207, %v197, 0
        %v212 = vsel %vm207, %v198, 0
        %v215 = vsel %vm207, %v199, 0
        %v218 = vsel %vm207, %v200, 0
        %v221 = vsel %vm207, %v201, 0
        %v224 = vsel %vm207, %v202, 0
        %v227 = vsel %vm207, %v203, 0
        %v230 = vsel %vm207, %v204, 0
        %232 = vmatprep.subr.mxu0 0.0
        %233 = vmatpush1.msra.mxu0 %v205
        %234 = vmatprep.subr.mxu0 0.0
        %235 = vmatpush1.msra.mxu0 %v206
        %236 = vmatprep.subr.mxu0 0.0
        %237 = vmatpush1.msra.mxu0 0.0
        %238 = vmatprep.subr.mxu0 0.0
        %239 = vmatpush1.msra.mxu0 0.0
        %240 = vmatprep.subr.mxu0 0.0
        %241 = vmatpush1.msra.mxu0 0.0
        %242 = vmatprep.subr.mxu0 0.0
        %243 = vmatpush1.msra.mxu0 0.0
        %244 = vmatprep.subr.mxu0 0.0
        %245 = vmatpush1.msra.mxu0 0.0
        %246 = vmatprep.subr.mxu0 0.0
        %247 = vmatpush1.msra.mxu0 0.0
        %248 = vmatprep.subr.mxu0 0.0
        %249 = vmatpush1.msra.mxu0 0.0
        %250 = vmatprep.subr.mxu0 0.0
        %251 = vmatpush1.msra.mxu0 0.0
        %252 = vmatprep.subr.mxu0 0.0
        %253 = vmatpush1.msra.mxu0 0.0
        %254 = vmatprep.subr.mxu0 0.0
        %255 = vmatpush1.msra.mxu0 0.0
        %256 = vmatprep.subr.mxu0 0.0
        %257 = vmatpush1.msra.mxu0 0.0
        %258 = vmatprep.subr.mxu0 0.0
        %259 = vmatpush1.msra.mxu0 0.0
        %260 = vmatprep.subr.mxu0 0.0
        %261 = vmatpush1.msra.mxu0 0.0
        %262 = vmatprep.subr.mxu0 0.0
        %263 = vmatpush1.msra.mxu0 0.0
        %264 = vmatprep.subr.mxu0 0.0
        %265 = vmatpush1.msra.mxu0 0.0
        %266 = vmatprep.subr.mxu0 0.0
        %267 = vmatpush1.msra.mxu0 0.0
        %268 = vmatprep.subr.mxu0 0.0
        %269 = vmatpush1.msra.mxu0 0.0
        %270 = vmatprep.subr.mxu0 0.0
        %271 = vmatpush1.msra.mxu0 0.0
        %272 = vmatprep.subr.mxu0 0.0
        %273 = vmatpush1.msra.mxu0 0.0
        %274 = vmatprep.subr.mxu0 0.0
        %275 = vmatpush1.msra.mxu0 0.0
        %276 = vmatprep.subr.mxu0 0.0
        %277 = vmatpush1.msra.mxu0 0.0
        %278 = vmatprep.subr.mxu0 0.0
        %279 = vmatpush1.msra.mxu0 0.0
        %280 = vmatprep.subr.mxu0 0.0
        %281 = vmatpush1.msra.mxu0 0.0
        %282 = vmatprep.subr.mxu0 0.0
        %283 = vmatpush1.msra.mxu0 0.0
        %284 = vmatprep.subr.mxu0 0.0
        %285 = vmatpush1.msra.mxu0 0.0
        %286 = vmatprep.subr.mxu0 0.0
        %287 = vmatpush1.msra.mxu0 0.0
        %288 = vmatprep.subr.mxu0 0.0
        %289 = vmatpush1.msra.mxu0 0.0
        %290 = vmatprep.subr.mxu0 0.0
        %291 = vmatpush1.msra.mxu0 0.0
        %292 = vmatprep.subr.mxu0 0.0
        %293 = vmatpush1.msra.mxu0 0.0
        %294 = vmatprep.subr.mxu0 0.0
        %295 = vmatpush1.msra.mxu0 0.0
        %296 = vmatprep.mubr.f32.mxu0 0.0
        %297 = vmatmul.mubr.f32.gmra.mrb[0].mxu0 %v209
        %v298 = vpop.f32.mrb[0].mxu0
        %v299 = vadd.f32 0.0, %v298
        %v300 = vpop.f32.mrb[0].mxu0
        %301 = vmatprep.mubr.f32.mxu0 0.0
        %302 = vmatmul.mubr.f32.gmra.mrb[0].mxu0 %v212
        %v303 = vpop.f32.mrb[0].mxu0
        %v304 = vadd.f32 0.0, %v303
        %v305 = vpop.f32.mrb[0].mxu0
        %306 = vmatprep.mubr.f32.mxu0 0.0
        %307 = vmatmul.mubr.f32.gmra.mrb[0].mxu0 %v215
        %v308 = vpop.f32.mrb[0].mxu0
        %v309 = vadd.f32 0.0, %v308
        %v310 = vpop.f32.mrb[0].mxu0
        %311 = vmatprep.mubr.f32.mxu0 0.0
        %312 = vmatmul.mubr.f32.gmra.mrb[0].mxu0 %v218
        %v313 = vpop.f32.mrb[0].mxu0
        %v314 = vadd.f32 0.0, %v313
        %v315 = vpop.f32.mrb[0].mxu0
        %316 = vmatprep.mubr.f32.mxu0 0.0
        %317 = vmatmul.mubr.f32.gmra.mrb[0].mxu0 %v221
        %v318 = vpop.f32.mrb[0].mxu0
        %v319 = vadd.f32 0.0, %v318
        %v320 = vpop.f32.mrb[0].mxu0
        %321 = vmatprep.mubr.f32.mxu0 0.0
        %322 = vmatmul.mubr.f32.gmra.mrb[0].mxu0 %v224
        %v323 = vpop.f32.mrb[0].mxu0
        %v324 = vadd.f32 0.0, %v323
        %v325 = vpop.f32.mrb[0].mxu0
        %326 = vmatprep.mubr.f32.mxu0 0.0
        %327 = vmatmul.mubr.f32.gmra.mrb[0].mxu0 %v227
        %v328 = vpop.f32.mrb[0].mxu0
        %v329 = vadd.f32 0.0, %v328
        %v330 = vpop.f32.mrb[0].mxu0
        %331 = vmatprep.mubr.f32.mxu0 0.0
        %332 = vmatmul.mubr.f32.gmra.mrb[0].mxu0 %v230
        %v333 = vpop.f32.mrb[0].mxu0
        %v334 = vadd.f32 0.0, %v333
        %v335 = vpop.f32.mrb[0].mxu0
        %336 = vdwg.mxu0
        %v337 = vlaneseq
        %v338 = vshrl.u32 %v337, 7
        %v339 = vadd.s32 %v338, 8
        %v340 = vadd.s32 %v338, 16
        %v341 = vadd.s32 %v338, 24
        %v342 = vlaneseq
        %v343 = vand.u32 %v342, 127
        %v344 = vmul.u32 %v343, 2
        %vm345 = vcmp.ge.s32.totalorder %v338, %v344
        %vm346 = vcmp.ge.s32.totalorder %v339, %v344
        %vm347 = vcmp.ge.s32.totalorder %v340, %v344
        %vm348 = vcmp.ge.s32.totalorder %v341, %v344
        %v349 = vadd.s32 %v343, 1
        %v350 = vmul.u32 %v349, 2
        %vm351 = vcmp.lt.s32.totalorder %v338, %v350
        %vm352 = vcmp.lt.s32.totalorder %v339, %v350
        %vm353 = vcmp.lt.s32.totalorder %v340, %v350
        %vm354 = vcmp.lt.s32.totalorder %v341, %v350
        %vm355 = vmand %vm345, %vm351
        %vm356 = vmand %vm346, %vm352
        %vm357 = vmand %vm347, %vm353
        %vm358 = vmand %vm348, %vm354
        %v359 = vsel %vm355, 1.0, 0.0
        %v360 = vsel %vm356, 1.0, 0.0
        %v361 = vsel %vm357, 1.0, 0.0
        %v362 = vsel %vm358, 1.0, 0.0
        %v364 = vsel %vm207, %v359, 0
        %v367 = vsel %vm207, %v360, 0
        %v370 = vsel %vm207, %v361, 0
        %v373 = vsel %vm207, %v362, 0
        %375 = vmatprep.subr.mxu0 0.0
        %376 = vmatpush1.msra.mxu0 %v299
        %377 = vmatprep.subr.mxu0 0.0
        %378 = vmatpush1.msra.mxu0 %v304
        %379 = vmatprep.subr.mxu0 0.0
        %380 = vmatpush1.msra.mxu0 0.0
        %381 = vmatprep.subr.mxu0 0.0
        %382 = vmatpush1.msra.mxu0 0.0
        %383 = vmatprep.subr.mxu0 0.0
        %384 = vmatpush1.msra.mxu0 0.0
        %385 = vmatprep.subr.mxu0 0.0
        %386 = vmatpush1.msra.mxu0 0.0
        %387 = vmatprep.subr.mxu0 0.0
        %388 = vmatpush1.msra.mxu0 0.0
        %389 = vmatprep.subr.mxu0 0.0
        %390 = vmatpush1.msra.mxu0 0.0
        %391 = vmatprep.subr.mxu0 0.0
        %392 = vmatpush1.msra.mxu0 0.0
        %393 = vmatprep.subr.mxu0 0.0
        %394 = vmatpush1.msra.mxu0 0.0
        %395 = vmatprep.subr.mxu0 0.0
        %396 = vmatpush1.msra.mxu0 0.0
        %397 = vmatprep.subr.mxu0 0.0
        %398 = vmatpush1.msra.mxu0 0.0
        %399 = vmatprep.subr.mxu0 0.0
        %400 = vmatpush1.msra.mxu0 0.0
        %401 = vmatprep.subr.mxu0 0.0
        %402 = vmatpush1.msra.mxu0 0.0
        %403 = vmatprep.subr.mxu0 0.0
        %404 = vmatpush1.msra.mxu0 0.0
        %405 = vmatprep.subr.mxu0 0.0
        %406 = vmatpush1.msra.mxu0 0.0
        %407 = vmatprep.subr.mxu0 0.0
        %408 = vmatpush1.msra.mxu0 0.0
        %409 = vmatprep.subr.mxu0 0.0
        %410 = vmatpush1.msra.mxu0 0.0
        %411 = vmatprep.subr.mxu0 0.0
        %412 = vmatpush1.msra.mxu0 0.0
        %413 = vmatprep.subr.mxu0 0.0
        %414 = vmatpush1.msra.mxu0 0.0
        %415 = vmatprep.subr.mxu0 0.0
        %416 = vmatpush1.msra.mxu0 0.0
        %417 = vmatprep.subr.mxu0 0.0
        %418 = vmatpush1.msra.mxu0 0.0
        %419 = vmatprep.subr.mxu0 0.0
        %420 = vmatpush1.msra.mxu0 0.0
        %421 = vmatprep.subr.mxu0 0.0
        %422 = vmatpush1.msra.mxu0 0.0
        %423 = vmatprep.subr.mxu0 0.0
        %424 = vmatpush1.msra.mxu0 0.0
        %425 = vmatprep.subr.mxu0 0.0
        %426 = vmatpush1.msra.mxu0 0.0
        %427 = vmatprep.subr.mxu0 0.0
        %428 = vmatpush1.msra.mxu0 0.0
        %429 = vmatprep.subr.mxu0 0.0
        %430 = vmatpush1.msra.mxu0 0.0
        %431 = vmatprep.subr.mxu0 0.0
        %432 = vmatpush1.msra.mxu0 0.0
        %433 = vmatprep.subr.mxu0 0.0
        %434 = vmatpush1.msra.mxu0 0.0
        %435 = vmatprep.subr.mxu0 0.0
        %436 = vmatpush1.msra.mxu0 0.0
        %437 = vmatprep.subr.mxu0 0.0
        %438 = vmatpush1.msra.mxu0 0.0
        %439 = vmatprep.mubr.f32.mxu0 0.0
        %440 = vmatmul.mubr.f32.gmra.mrb[0].mxu0 %v364
        %v441 = vpop.f32.mrb[0].mxu0
        %v442 = vadd.f32 0.0, %v441
        %v443 = vpop.f32.mrb[0].mxu0
        %444 = vmatprep.mubr.f32.mxu0 0.0
        %445 = vmatmul.mubr.f32.gmra.mrb[0].mxu0 %v367
        %v446 = vpop.f32.mrb[0].mxu0
        %v447 = vadd.f32 0.0, %v446
        %v448 = vpop.f32.mrb[0].mxu0
        %449 = vmatprep.mubr.f32.mxu0 0.0
        %450 = vmatmul.mubr.f32.gmra.mrb[0].mxu0 %v370
        %v451 = vpop.f32.mrb[0].mxu0
        %v452 = vadd.f32 0.0, %v451
        %v453 = vpop.f32.mrb[0].mxu0
        %454 = vmatprep.mubr.f32.mxu0 0.0
        %455 = vmatmul.mubr.f32.gmra.mrb[0].mxu0 %v373
        %v456 = vpop.f32.mrb[0].mxu0
        %v457 = vadd.f32 0.0, %v456
        %v458 = vpop.f32.mrb[0].mxu0
        %459 = vdwg.mxu0
        %460 = vmatprep.subr.mxu0 0.0
        %461 = vmatpush1.msra.mxu0 %v309
        %462 = vmatprep.subr.mxu0 0.0
        %463 = vmatpush1.msra.mxu0 %v314
        %464 = vmatprep.subr.mxu0 0.0
        %465 = vmatpush1.msra.mxu0 0.0
        %466 = vmatprep.subr.mxu0 0.0
        %467 = vmatpush1.msra.mxu0 0.0
        %468 = vmatprep.subr.mxu0 0.0
        %469 = vmatpush1.msra.mxu0 0.0
        %470 = vmatprep.subr.mxu0 0.0
        %471 = vmatpush1.msra.mxu0 0.0
        %472 = vmatprep.subr.mxu0 0.0
        %473 = vmatpush1.msra.mxu0 0.0
        %474 = vmatprep.subr.mxu0 0.0
        %475 = vmatpush1.msra.mxu0 0.0
        %476 = vmatprep.subr.mxu0 0.0
        %477 = vmatpush1.msra.mxu0 0.0
        %478 = vmatprep.subr.mxu0 0.0
        %479 = vmatpush1.msra.mxu0 0.0
        %480 = vmatprep.subr.mxu0 0.0
        %481 = vmatpush1.msra.mxu0 0.0
        %482 = vmatprep.subr.mxu0 0.0
        %483 = vmatpush1.msra.mxu0 0.0
        %484 = vmatprep.subr.mxu0 0.0
        %485 = vmatpush1.msra.mxu0 0.0
        %486 = vmatprep.subr.mxu0 0.0
        %487 = vmatpush1.msra.mxu0 0.0
        %488 = vmatprep.subr.mxu0 0.0
        %489 = vmatpush1.msra.mxu0 0.0
        %490 = vmatprep.subr.mxu0 0.0
        %491 = vmatpush1.msra.mxu0 0.0
        %492 = vmatprep.subr.mxu0 0.0
        %493 = vmatpush1.msra.mxu0 0.0
        %494 = vmatprep.subr.mxu0 0.0
        %495 = vmatpush1.msra.mxu0 0.0
        %496 = vmatprep.subr.mxu0 0.0
        %497 = vmatpush1.msra.mxu0 0.0
        %498 = vmatprep.subr.mxu0 0.0
        %499 = vmatpush1.msra.mxu0 0.0
        %500 = vmatprep.subr.mxu0 0.0
        %501 = vmatpush1.msra.mxu0 0.0
        %502 = vmatprep.subr.mxu0 0.0
        %503 = vmatpush1.msra.mxu0 0.0
        %504 = vmatprep.subr.mxu0 0.0
        %505 = vmatpush1.msra.mxu0 0.0
        %506 = vmatprep.subr.mxu0 0.0
        %507 = vmatpush1.msra.mxu0 0.0
        %508 = vmatprep.subr.mxu0 0.0
        %509 = vmatpush1.msra.mxu0 0.0
        %510 = vmatprep.subr.mxu0 0.0
        %511 = vmatpush1.msra.mxu0 0.0
        %512 = vmatprep.subr.mxu0 0.0
        %513 = vmatpush1.msra.mxu0 0.0
        %514 = vmatprep.subr.mxu0 0.0
        %515 = vmatpush1.msra.mxu0 0.0
        %516 = vmatprep.subr.mxu0 0.0
        %517 = vmatpush1.msra.mxu0 0.0
        %518 = vmatprep.subr.mxu0 0.0
        %519 = vmatpush1.msra.mxu0 0.0
        %520 = vmatprep.subr.mxu0 0.0
        %521 = vmatpush1.msra.mxu0 0.0
        %522 = vmatprep.subr.mxu0 0.0
        %523 = vmatpush1.msra.mxu0 0.0
        %524 = vmatprep.mubr.f32.mxu0 0.0
        %525 = vmatmul.mubr.f32.gmra.mrb[0].mxu0 %v364
        %v526 = vpop.f32.mrb[0].mxu0
        %v527 = vadd.f32 0.0, %v526
        %v528 = vpop.f32.mrb[0].mxu0
        %529 = vmatprep.mubr.f32.mxu0 0.0
        %530 = vmatmul.mubr.f32.gmra.mrb[0].mxu0 %v367
        %v531 = vpop.f32.mrb[0].mxu0
        %v532 = vadd.f32 0.0, %v531
        %v533 = vpop.f32.mrb[0].mxu0
        %534 = vmatprep.mubr.f32.mxu0 0.0
        %535 = vmatmul.mubr.f32.gmra.mrb[0].mxu0 %v370
        %v536 = vpop.f32.mrb[0].mxu0
        %v537 = vadd.f32 0.0, %v536
        %v538 = vpop.f32.mrb[0].mxu0
        %539 = vmatprep.mubr.f32.mxu0 0.0
        %540 = vmatmul.mubr.f32.gmra.mrb[0].mxu0 %v373
        %v541 = vpop.f32.mrb[0].mxu0
        %v542 = vadd.f32 0.0, %v541
        %v543 = vpop.f32.mrb[0].mxu0
        %544 = vdwg.mxu0
        %545 = vmatprep.subr.mxu0 0.0
        %546 = vmatpush1.msra.mxu0 %v319
        %547 = vmatprep.subr.mxu0 0.0
        %548 = vmatpush1.msra.mxu0 %v324
        %549 = vmatprep.subr.mxu0 0.0
        %550 = vmatpush1.msra.mxu0 0.0
        %551 = vmatprep.subr.mxu0 0.0
        %552 = vmatpush1.msra.mxu0 0.0
        %553 = vmatprep.subr.mxu0 0.0
        %554 = vmatpush1.msra.mxu0 0.0
        %555 = vmatprep.subr.mxu0 0.0
        %556 = vmatpush1.msra.mxu0 0.0
        %557 = vmatprep.subr.mxu0 0.0
        %558 = vmatpush1.msra.mxu0 0.0
        %559 = vmatprep.subr.mxu0 0.0
        %560 = vmatpush1.msra.mxu0 0.0
        %561 = vmatprep.subr.mxu0 0.0
        %562 = vmatpush1.msra.mxu0 0.0
        %563 = vmatprep.subr.mxu0 0.0
        %564 = vmatpush1.msra.mxu0 0.0
        %565 = vmatprep.subr.mxu0 0.0
        %566 = vmatpush1.msra.mxu0 0.0
        %567 = vmatprep.subr.mxu0 0.0
        %568 = vmatpush1.msra.mxu0 0.0
        %569 = vmatprep.subr.mxu0 0.0
        %570 = vmatpush1.msra.mxu0 0.0
        %571 = vmatprep.subr.mxu0 0.0
        %572 = vmatpush1.msra.mxu0 0.0
        %573 = vmatprep.subr.mxu0 0.0
        %574 = vmatpush1.msra.mxu0 0.0
        %575 = vmatprep.subr.mxu0 0.0
        %576 = vmatpush1.msra.mxu0 0.0
        %577 = vmatprep.subr.mxu0 0.0
        %578 = vmatpush1.msra.mxu0 0.0
        %579 = vmatprep.subr.mxu0 0.0
        %580 = vmatpush1.msra.mxu0 0.0
        %581 = vmatprep.subr.mxu0 0.0
        %582 = vmatpush1.msra.mxu0 0.0
        %583 = vmatprep.subr.mxu0 0.0
        %584 = vmatpush1.msra.mxu0 0.0
        %585 = vmatprep.subr.mxu0 0.0
        %586 = vmatpush1.msra.mxu0 0.0
        %587 = vmatprep.subr.mxu0 0.0
        %588 = vmatpush1.msra.mxu0 0.0
        %589 = vmatprep.subr.mxu0 0.0
        %590 = vmatpush1.msra.mxu0 0.0
        %591 = vmatprep.subr.mxu0 0.0
        %592 = vmatpush1.msra.mxu0 0.0
        %593 = vmatprep.subr.mxu0 0.0
        %594 = vmatpush1.msra.mxu0 0.0
        %595 = vmatprep.subr.mxu0 0.0
        %596 = vmatpush1.msra.mxu0 0.0
        %597 = vmatprep.subr.mxu0 0.0
        %598 = vmatpush1.msra.mxu0 0.0
        %599 = vmatprep.subr.mxu0 0.0
        %600 = vmatpush1.msra.mxu0 0.0
        %601 = vmatprep.subr.mxu0 0.0
        %602 = vmatpush1.msra.mxu0 0.0
        %603 = vmatprep.subr.mxu0 0.0
        %604 = vmatpush1.msra.mxu0 0.0
        %605 = vmatprep.subr.mxu0 0.0
        %606 = vmatpush1.msra.mxu0 0.0
        %607 = vmatprep.subr.mxu0 0.0
        %608 = vmatpush1.msra.mxu0 0.0
        %609 = vmatprep.mubr.f32.mxu0 0.0
        %610 = vmatmul.mubr.f32.gmra.mrb[0].mxu0 %v364
        %v611 = vpop.f32.mrb[0].mxu0
        %v612 = vadd.f32 0.0, %v611
        %v613 = vpop.f32.mrb[0].mxu0
        %614 = vmatprep.mubr.f32.mxu0 0.0
        %615 = vmatmul.mubr.f32.gmra.mrb[0].mxu0 %v367
        %v616 = vpop.f32.mrb[0].mxu0
        %v617 = vadd.f32 0.0, %v616
        %v618 = vpop.f32.mrb[0].mxu0
        %619 = vmatprep.mubr.f32.mxu0 0.0
        %620 = vmatmul.mubr.f32.gmra.mrb[0].mxu0 %v370
        %v621 = vpop.f32.mrb[0].mxu0
        %v622 = vadd.f32 0.0, %v621
        %v623 = vpop.f32.mrb[0].mxu0
        %624 = vmatprep.mubr.f32.mxu0 0.0
        %625 = vmatmul.mubr.f32.gmra.mrb[0].mxu0 %v373
        %v626 = vpop.f32.mrb[0].mxu0
        %v627 = vadd.f32 0.0, %v626
        %v628 = vpop.f32.mrb[0].mxu0
        %629 = vdwg.mxu0
        %630 = vmatprep.subr.mxu0 0.0
        %631 = vmatpush1.msra.mxu0 %v329
        %632 = vmatprep.subr.mxu0 0.0
        %633 = vmatpush1.msra.mxu0 %v334
        %634 = vmatprep.subr.mxu0 0.0
        %635 = vmatpush1.msra.mxu0 0.0
        %636 = vmatprep.subr.mxu0 0.0
        %637 = vmatpush1.msra.mxu0 0.0
        %638 = vmatprep.subr.mxu0 0.0
        %639 = vmatpush1.msra.mxu0 0.0
        %640 = vmatprep.subr.mxu0 0.0
        %641 = vmatpush1.msra.mxu0 0.0
        %642 = vmatprep.subr.mxu0 0.0
        %643 = vmatpush1.msra.mxu0 0.0
        %644 = vmatprep.subr.mxu0 0.0
        %645 = vmatpush1.msra.mxu0 0.0
        %646 = vmatprep.subr.mxu0 0.0
        %647 = vmatpush1.msra.mxu0 0.0
        %648 = vmatprep.subr.mxu0 0.0
        %649 = vmatpush1.msra.mxu0 0.0
        %650 = vmatprep.subr.mxu0 0.0
        %651 = vmatpush1.msra.mxu0 0.0
        %652 = vmatprep.subr.mxu0 0.0
        %653 = vmatpush1.msra.mxu0 0.0
        %654 = vmatprep.subr.mxu0 0.0
        %655 = vmatpush1.msra.mxu0 0.0
        %656 = vmatprep.subr.mxu0 0.0
        %657 = vmatpush1.msra.mxu0 0.0
        %658 = vmatprep.subr.mxu0 0.0
        %659 = vmatpush1.msra.mxu0 0.0
        %660 = vmatprep.subr.mxu0 0.0
        %661 = vmatpush1.msra.mxu0 0.0
        %662 = vmatprep.subr.mxu0 0.0
        %663 = vmatpush1.msra.mxu0 0.0
        %664 = vmatprep.subr.mxu0 0.0
        %665 = vmatpush1.msra.mxu0 0.0
        %666 = vmatprep.subr.mxu0 0.0
        %667 = vmatpush1.msra.mxu0 0.0
        %668 = vmatprep.subr.mxu0 0.0
        %669 = vmatpush1.msra.mxu0 0.0
        %670 = vmatprep.subr.mxu0 0.0
        %671 = vmatpush1.msra.mxu0 0.0
        %672 = vmatprep.subr.mxu0 0.0
        %673 = vmatpush1.msra.mxu0 0.0
        %674 = vmatprep.subr.mxu0 0.0
        %675 = vmatpush1.msra.mxu0 0.0
        %676 = vmatprep.subr.mxu0 0.0
        %677 = vmatpush1.msra.mxu0 0.0
        %678 = vmatprep.subr.mxu0 0.0
        %679 = vmatpush1.msra.mxu0 0.0
        %680 = vmatprep.subr.mxu0 0.0
        %681 = vmatpush1.msra.mxu0 0.0
        %682 = vmatprep.subr.mxu0 0.0
        %683 = vmatpush1.msra.mxu0 0.0
        %684 = vmatprep.subr.mxu0 0.0
        %685 = vmatpush1.msra.mxu0 0.0
        %686 = vmatprep.subr.mxu0 0.0
        %687 = vmatpush1.msra.mxu0 0.0
        %688 = vmatprep.subr.mxu0 0.0
        %689 = vmatpush1.msra.mxu0 0.0
        %690 = vmatprep.subr.mxu0 0.0
        %691 = vmatpush1.msra.mxu0 0.0
        %692 = vmatprep.subr.mxu0 0.0
        %693 = vmatpush1.msra.mxu0 0.0
        %694 = vmatprep.mubr.f32.mxu0 0.0
        %695 = vmatmul.mubr.f32.gmra.mrb[0].mxu0 %v364
        %v696 = vpop.f32.mrb[0].mxu0
        %v697 = vadd.f32 0.0, %v696
        %v698 = vpop.f32.mrb[0].mxu0
        %699 = vmatprep.mubr.f32.mxu0 0.0
        %700 = vmatmul.mubr.f32.gmra.mrb[0].mxu0 %v367
        %v701 = vpop.f32.mrb[0].mxu0
        %v702 = vadd.f32 0.0, %v701
        %v703 = vpop.f32.mrb[0].mxu0
        %704 = vmatprep.mubr.f32.mxu0 0.0
        %705 = vmatmul.mubr.f32.gmra.mrb[0].mxu0 %v370
        %v706 = vpop.f32.mrb[0].mxu0
        %v707 = vadd.f32 0.0, %v706
        %v708 = vpop.f32.mrb[0].mxu0
        %709 = vmatprep.mubr.f32.mxu0 0.0
        %710 = vmatmul.mubr.f32.gmra.mrb[0].mxu0 %v373
        %v711 = vpop.f32.mrb[0].mxu0
        %v712 = vadd.f32 0.0, %v711
        %v713 = vpop.f32.mrb[0].mxu0
        %714 = vdwg.mxu0
        %vm715 = vcmask 261120
        %716 = vst.msk [vmem:[%s194] sm:$0xff] %vm715, %v442
        %717 = vst.msk [vmem:[%s194 + $0x8] sm:$0xff] %vm715, %v447
        %718 = vst.msk [vmem:[%s194 + $0x10] sm:$0xff] %vm715, %v452
        %719 = vst.msk [vmem:[%s194 + $0x18] sm:$0xff] %vm715, %v457
        %720 = vst.msk [vmem:[%s194 + $0x20] sm:$0xff] %vm715, %v527
        %721 = vst.msk [vmem:[%s194 + $0x28] sm:$0xff] %vm715, %v532
        %722 = vst.msk [vmem:[%s194 + $0x30] sm:$0xff] %vm715, %v537
        %723 = vst.msk [vmem:[%s194 + $0x38] sm:$0xff] %vm715, %v542
        %724 = vst.msk [vmem:[%s194 + $0x40] sm:$0xff] %vm715, %v612
        %725 = vst.msk [vmem:[%s194 + $0x48] sm:$0xff] %vm715, %v617
        %726 = vst.msk [vmem:[%s194 + $0x50] sm:$0xff] %vm715, %v622
        %727 = vst.msk [vmem:[%s194 + $0x58] sm:$0xff] %vm715, %v627
        %728 = vst.msk [vmem:[%s194 + $0x60] sm:$0xff] %vm715, %v697
        %729 = vst.msk [vmem:[%s194 + $0x68] sm:$0xff] %vm715, %v702
        %730 = vst.msk [vmem:[%s194 + $0x70] sm:$0xff] %vm715, %v707
        %731 = vst.msk [vmem:[%s194 + $0x78] sm:$0xff] %vm715, %v712
        %s732 = sand.u32 %s91, 1
        %s733 = scalar_lea.sflag [#allocation4], %s732
        %s734 = sand.u32 %s91, 1
        %s735 = smul.addr %s734, 128
        %s736 = scalar_lea.vmem [#allocation7], %s735
        // Predicated region
        $region37: #{tpu_custom_call.1} parent=27 // pred_check
          %p737 = pneg %p101
        $region38: #{tpu_custom_call.1} parent=27 // pred_check_branch
          %739 = sbr.rel (%p737) target = $region40
        $region39: #{tpu_custom_call.1} parent=27 // pred_region
          %s740 = smul.u32 4, %s25
          %s742 = ssub.s32 2048, 2048
          %743 = vsyncadd %s733, %s742
          %s744 = smul.addr %s24, 16
          %s745 = sadd.s32 %s740, %s744
          %s746 = smul.addr %s745, 128
          %s747 = scalar_lea.hbm %s2, %s746
          %s748 = sshll.u32 %s736, 4
          %s749 = int_to_ptr.vmem [resolvable:$true] %s748
          %754 = dma.vmem_to_hbm [thread:$0]  %s749, 2048, %s747, %s733, 128, 128, 8
        $region40: #{tpu_custom_call.1} parent=27 // pred_fallthru
          _
      $region28: #{tpu_custom_call.1} parent=5 // pred_fallthru
        _
      %p755 = scmp.le.s32.totalorder 2, %s15
      // Predicated region
      $region41: #{tpu_custom_call.1} parent=5 // pred_check
        %p756 = pneg %p755
      $region42: #{tpu_custom_call.1} parent=5 // pred_check_branch
        %758 = sbr.rel (%p756) target = $region44
      $region43: #{tpu_custom_call.1} parent=5 // pred_region
        %s759 = ssub.s32 %s15, 2
        // Predicated region
        $region45: #{tpu_custom_call.1} parent=43 // pred_check
          %p760 = pneg %p107
        $region46: #{tpu_custom_call.1} parent=43 // pred_check_branch
          %762 = sbr.rel (%p760) target = $region48
        $region47: #{tpu_custom_call.1} parent=43 // pred_region
          %s763 = sand.u32 %s92, 1
          %s764 = scalar_lea.sflag [#allocation4], %s763
          %s765 = sand.u32 %s92, 1
          %s766 = smul.addr %s765, 128
          %s767 = scalar_lea.vmem [#allocation7], %s766
          %768 = dma.done %s764, 2048
        $region48: #{tpu_custom_call.1} parent=43 // pred_fallthru
          _
      $region44: #{tpu_custom_call.1} parent=5 // pred_fallthru
        _
    $region6: #{tpu_custom_call.1} parent=1 // loop_footer
      %s19 = sadd.s32 1, %s15
    $region7: #{tpu_custom_call.1} parent=1 // loop_footer_branch
      %14 = sbr.rel target = $region3
    $region8: #{tpu_custom_call.1} parent=1 // loop_exit
      _
    %769 = vsyncpa [#allocation3], 1
    %s770 = scalar_lea.sflag [#allocation3], 1
    %771 = vsyncpa %s770, 1
    %772 = vsyncpa [#allocation6], 1
    %773 = vsyncpa [#allocation4], 1
    %s774 = scalar_lea.sflag [#allocation4], 1
    %775 = vsyncpa %s774, 1

</llo_original>
